<compile_context>
chip_gen: v6e
topology: v6e:2x2x1
jax: 0.10.0
libtpu: 0.0.40
codegen_flags: <defaults>
</compile_context>

<pallas_src>
import functools

import jax
import jax.numpy as jnp
from jax import lax
from jax.experimental import pallas as pl
from jax.experimental.pallas import tpu as pltpu


def _round_up(v, m):
    return (v + m - 1) // m * m


# ----------------------------- Pallas kernel ------------------------------ #

def gine_fused_kernel(
        # scalar-prefetch (SMEM)
        src_ref, dst_ref,
        # inputs (VMEM)
        x_ref, ea_ref, we_ref, be_ref, w1_ref, b1_ref, w2_ref, b2_ref,
        # output (VMEM; block index constant across layers -> resident state)
        out_ref,
        # scratch
        e_buf, *accs,
        num_edges, eps, unroll):
    layer = pl.program_id(0)

    # Node features live in out_ref across all layers (single HBM writeback).
    @pl.when(layer == 0)
    def _():
        out_ref[...] = x_ref[...]

    # GINEConv.lin : edge_attr [E, EDp] @ We [EDp, Hp] + be   (bf16 MXU, f32 acc)
    e_buf[...] = jnp.dot(ea_ref[...], we_ref[...],
                         preferred_element_type=jnp.float32) + be_ref[...]

    # (1 + eps) * x_i folded into accumulator 0; remaining accumulators zeroed.
    if eps == 0.0:
        accs[0][...] = out_ref[...]
    else:
        accs[0][...] = (1.0 + eps) * out_ref[...]
    for a in accs[1:]:
        a[...] = jnp.zeros_like(a)

    nacc = len(accs)

    # message + aggregate: index-based gather / scatter-add.  Each unroll slot
    # writes its own accumulator -> independent RMW chains the scheduler can
    # overlap.
    def do_edge(k, acc):
        s = src_ref[k]
        d = dst_ref[k]
        msg = jnp.maximum(out_ref[pl.ds(s, 1), :] + e_buf[pl.ds(k, 1), :], 0.0)
        acc[pl.ds(d, 1), :] = acc[pl.ds(d, 1), :] + msg

    num_main = num_edges // unroll

    def edge_body(i, carry):
        base = i * unroll
        for u in range(unroll):
            do_edge(base + u, accs[u % nacc])
        return carry

    if num_main > 0:
        lax.fori_loop(0, num_main, edge_body, 0)
    for r in range(num_main * unroll, num_edges):   # static remainder
        do_edge(r, accs[r % nacc])

    out = accs[0][...]
    for a in accs[1:]:
        out = out + a[...]

    # h_theta : Linear -> ReLU -> Linear  (bf16 MXU operands, f32 accumulation)
    h = jnp.maximum(
        jnp.dot(out.astype(jnp.bfloat16), w1_ref[...],
                preferred_element_type=jnp.float32) + b1_ref[...], 0.0)
    y = jnp.dot(h.astype(jnp.bfloat16), w2_ref[...],
                preferred_element_type=jnp.float32) + b2_ref[...]

    out_ref[...] = y.astype(out_ref.dtype)


# ------------------------------- wrapper ----------------------------------- #

def gine_forward(x, edge_index, edge_attr, layer_params, eps=0.0, unroll=4):
    n, h = x.shape
    e, ed = edge_attr.shape
    num_layers = len(layer_params)

    hp = _round_up(h, 128)     # lane-dense hidden dim
    edp = _round_up(ed, 128)   # lane-dense edge-feature dim
    np_ = _round_up(n, 16)     # bf16 sublane-packing friendly
    ep = _round_up(max(e, 1), 16)

    unroll = int(max(1, min(unroll, max(e, 1))))

    f32, bf16 = jnp.float32, jnp.bfloat16

    def pad2(a, rows, cols, dt):
        buf = jnp.zeros((rows, cols), dt)
        return buf.at[:a.shape[0], :a.shape[1]].set(a.astype(dt))

    x_pad = pad2(x, np_, hp, f32)
    ea_pad = pad2(edge_attr, ep, edp, bf16)

    we = jnp.stack([pad2(p["We"], edp, hp, bf16) for p in layer_params])
    be = jnp.stack([pad2(p["be"], 1, hp, f32) for p in layer_params])
    w1 = jnp.stack([pad2(p["W1"], hp, hp, bf16) for p in layer_params])
    b1 = jnp.stack([pad2(p["b1"], 1, hp, f32) for p in layer_params])
    w2 = jnp.stack([pad2(p["W2"], hp, hp, bf16) for p in layer_params])
    b2 = jnp.stack([pad2(p["b2"], 1, hp, f32) for p in layer_params])

    src = jnp.zeros((ep,), jnp.int32).at[:e].set(edge_index[0].astype(jnp.int32))
    dst = jnp.zeros((ep,), jnp.int32).at[:e].set(edge_index[1].astype(jnp.int32))

    fixed = lambda l, *_: (0, 0)          # graph-level operands: DMA'd once
    per_layer = lambda l, *_: (l, 0, 0)   # weight stacks: one slab per layer

    grid_spec = pltpu.PrefetchScalarGridSpec(
        num_scalar_prefetch=2,
        grid=(num_layers,),
        in_specs=[
            pl.BlockSpec((np_, hp), fixed),            # x
            pl.BlockSpec((ep, edp), fixed),            # edge_attr
            pl.BlockSpec((None, edp, hp), per_layer),  # We
            pl.BlockSpec((None, 1, hp), per_layer),    # be
            pl.BlockSpec((None, hp, hp), per_layer),   # W1
            pl.BlockSpec((None, 1, hp), per_layer),    # b1
            pl.BlockSpec((None, hp, hp), per_layer),   # W2
            pl.BlockSpec((None, 1, hp), per_layer),    # b2
        ],
        out_specs=pl.BlockSpec((np_, hp), fixed),
        scratch_shapes=[pltpu.VMEM((ep, hp), f32)]                 # edge features
                      + [pltpu.VMEM((np_, hp), f32) for _ in range(unroll)],
    )

    flops = int(num_layers * (2 * ep * edp * hp + 4 * np_ * hp * hp + 3 * e * hp))
    bytes_accessed = int(
        4 * np_ * hp * 2 + 2 * ep * edp + 4 * 2 * ep
        + num_layers * (2 * (edp * hp + 2 * hp * hp) + 4 * 3 * hp))

    kernel = functools.partial(gine_fused_kernel, num_edges=e, eps=eps,
                               unroll=unroll)
    out = pl.pallas_call(
        kernel,
        grid_spec=grid_spec,
        out_shape=jax.ShapeDtypeStruct((np_, hp), f32),
        compiler_params=pltpu.CompilerParams(
            dimension_semantics=("arbitrary",)),
        cost_estimate=pl.CostEstimate(flops=flops, transcendentals=0,
                                      bytes_accessed=bytes_accessed),
    )(src, dst, x_pad, ea_pad, we, be, w1, b1, w2, b2)

    return out[:n, :h]


# ------------------------------ references --------------------------------- #

def init_layer_params(key, hidden_dim, edge_dim):
    k = jax.random.split(key, 6)

    def glorot(k_, fan_in, fan_out):
        lim = 0.5 * (6.0 / (fan_in + fan_out)) ** 0.5
        return jax.random.uniform(k_, (fan_in, fan_out), jnp.float32, -lim, lim)

    return {
        "We": glorot(k[0], edge_dim, hidden_dim),
        "be": 0.1 * jax.random.normal(k[1], (1, hidden_dim), jnp.float32),
        "W1": glorot(k[2], hidden_dim, hidden_dim),
        "b1": 0.1 * jax.random.normal(k[3], (1, hidden_dim), jnp.float32),
        "W2": glorot(k[4], hidden_dim, hidden_dim),
        "b2": 0.1 * jax.random.normal(k[5], (1, hidden_dim), jnp.float32),
    }


def gine_layer_ref(x, edge_attr, src, dst, p, eps=0.0, matmul_dtype=jnp.float32):
    """Pure-JAX GINEConvLayer.forward (gather / scatter-add) reference."""
    c = lambda a: a.astype(matmul_dtype)
    e = jnp.dot(c(edge_attr), c(p["We"]),
                preferred_element_type=jnp.float32) + p["be"]
    msg = jnp.maximum(x[src] + e, 0.0)
    agg = jnp.zeros_like(x).at[dst].add(msg)
    out = agg + (1.0 + eps) * x
    h = jnp.maximum(jnp.dot(c(out), c(p["W1"]),
                            preferred_element_type=jnp.float32) + p["b1"], 0.0)
    return jnp.dot(c(h), c(p["W2"]),
                   preferred_element_type=jnp.float32) + p["b2"]


def gine_forward_ref(x, edge_index, edge_attr, layer_params, eps=0.0,
                     matmul_dtype=jnp.float32):
    src, dst = edge_index[0], edge_index[1]
    for p in layer_params:
        x = gine_layer_ref(x, edge_attr, src, dst, p, eps, matmul_dtype)
    return x


# ---------------------------------- main ------------------------------------ #

if __name__ == "__main__":
    N, E, H, ED = 16, 48, 32, 8   # nodes, edges, hidden dim, edge feature dim
    NUM_LAYERS = 2                # stacked GINEConvLayer modules

    key = jax.random.PRNGKey(0)
    kx, ke, ki, kp = jax.random.split(key, 4)

    x = jax.random.normal(kx, (N, H), jnp.float32)
    edge_attr = jax.random.normal(ke, (E, ED), jnp.float32)
    edge_index = jax.random.randint(ki, (2, E), 0, N, jnp.int32)

    layer_params = [init_layer_params(k, H, ED)
                    for k in jax.random.split(kp, NUM_LAYERS)]

    out = gine_forward(x, edge_index, edge_attr, layer_params, eps=0.0)
    out = jax.block_until_ready(out)
    assert out.shape == (N, H)

    # Structure check: reference with the same bf16-operand / f32-accum matmuls.
    ref_bf16 = gine_forward_ref(x, edge_index, edge_attr, layer_params,
                                matmul_dtype=jnp.bfloat16)
    assert jnp.allclose(out, ref_bf16, atol=5e-3, rtol=5e-3), \
        "mismatch vs bf16-matched reference"

    # Sanity vs full-f32 reference (difference is only bf16 matmul rounding).
    ref_f32 = gine_forward_ref(x, edge_index, edge_attr, layer_params)
    max_diff = float(jnp.max(jnp.abs(out - ref_f32)))
    assert max_diff < 0.1, f"bf16 rounding drift too large: {max_diff}"

    print("KERNEL_OK")
</pallas_src>

<mosaic_0001>
module attributes {stable_mosaic.version = 11 : i64} {
  func.func @gine_fused_kernel(%arg0: i32, %arg1: memref<48xi32, #tpu.memory_space<smem>>, %arg2: memref<48xi32, #tpu.memory_space<smem>>, %arg3: memref<16x128xf32, #tpu.memory_space<vmem>>, %arg4: memref<48x128xbf16, #tpu.memory_space<vmem>>, %arg5: memref<1x128x128xbf16, #tpu.memory_space<vmem>>, %arg6: memref<1x1x128xf32, #tpu.memory_space<vmem>>, %arg7: memref<1x128x128xbf16, #tpu.memory_space<vmem>>, %arg8: memref<1x1x128xf32, #tpu.memory_space<vmem>>, %arg9: memref<1x128x128xbf16, #tpu.memory_space<vmem>>, %arg10: memref<1x1x128xf32, #tpu.memory_space<vmem>>, %arg11: memref<16x128xf32, #tpu.memory_space<vmem>>, %arg12: memref<48x128xf32, #tpu.memory_space<vmem>>, %arg13: memref<16x128xf32, #tpu.memory_space<vmem>>, %arg14: memref<16x128xf32, #tpu.memory_space<vmem>>, %arg15: memref<16x128xf32, #tpu.memory_space<vmem>>, %arg16: memref<16x128xf32, #tpu.memory_space<vmem>>) attributes {dimension_semantics = [#tpu.dimension_semantics<arbitrary>], iteration_bounds = array<i64: 2>, scalar_prefetch = 2 : i64, scratch_operands = 5 : i64, tpu.core_type = #tpu.core_type<tc>, window_params = [{pipeline_mode = #tpu.pipeline_mode<synchronous>, transform_indices = @transform_0, window_bounds = array<i64: 16, 128>}, {pipeline_mode = #tpu.pipeline_mode<synchronous>, transform_indices = @transform_1, window_bounds = array<i64: 48, 128>}, {transform_indices = @transform_2, window_bounds = array<i64: 1, 128, 128>}, {transform_indices = @transform_3, window_bounds = array<i64: 1, 1, 128>}, {transform_indices = @transform_4, window_bounds = array<i64: 1, 128, 128>}, {transform_indices = @transform_5, window_bounds = array<i64: 1, 1, 128>}, {transform_indices = @transform_6, window_bounds = array<i64: 1, 128, 128>}, {transform_indices = @transform_7, window_bounds = array<i64: 1, 1, 128>}, {pipeline_mode = #tpu.pipeline_mode<synchronous>, transform_indices = @transform_8, window_bounds = array<i64: 16, 128>}]} {
    %c0_i32 = arith.constant 0 : i32
    %0 = arith.cmpi eq, %arg0, %c0_i32 : i32
    %1 = arith.extui %0 : i1 to i32
    %c0_i32_0 = arith.constant 0 : i32
    %2 = arith.cmpi ne, %1, %c0_i32_0 : i32
    scf.if %2 {
      %c0_50 = arith.constant 0 : index
      %c0_51 = arith.constant 0 : index
      %47 = vector.load %arg3[%c0_50, %c0_51] : memref<16x128xf32, #tpu.memory_space<vmem>>, vector<16x128xf32>
      %c0_52 = arith.constant 0 : index
      %c0_53 = arith.constant 0 : index
      %48 = vector.load %arg11[%c0_52, %c0_53] : memref<16x128xf32, #tpu.memory_space<vmem>>, vector<16x128xf32>
      tpu.vector_store %arg11[%c0_52, %c0_53], %47 {strides = array<i32>} : memref<16x128xf32, #tpu.memory_space<vmem>>, vector<16x128xf32>,
    } else {
    }
    %c0 = arith.constant 0 : index
    %c0_1 = arith.constant 0 : index
    %3 = vector.load %arg4[%c0, %c0_1] : memref<48x128xbf16, #tpu.memory_space<vmem>>, vector<48x128xbf16>
    %c0_2 = arith.constant 0 : index
    %c0_3 = arith.constant 0 : index
    %c0_4 = arith.constant 0 : index
    %4 = vector.load %arg5[%c0_2, %c0_3, %c0_4] : memref<1x128x128xbf16, #tpu.memory_space<vmem>>, vector<1x128x128xbf16>
    %5 = vector.shape_cast %4 : vector<1x128x128xbf16> to vector<128x128xbf16>
    %cst = arith.constant dense<0.000000e+00> : vector<48x128xf32>
    %6 = tpu.matmul %3, %5, %cst {dimension_numbers = #tpu.dot_dimension_numbers<[1], [0], [0], [1], [0, 0, 1, 1], [], []>} : vector<48x128xbf16>, vector<128x128xbf16>, vector<48x128xf32> -> vector<48x128xf32>
    %c0_5 = arith.constant 0 : index
    %c0_6 = arith.constant 0 : index
    %c0_7 = arith.constant 0 : index
    %7 = vector.load %arg6[%c0_5, %c0_6, %c0_7] : memref<1x1x128xf32, #tpu.memory_space<vmem>>, vector<1x1x128xf32>
    %8 = vector.shape_cast %7 : vector<1x1x128xf32> to vector<1x128xf32>
    %9 = vector.broadcast %8 : vector<1x128xf32> to vector<48x128xf32>
    %10 = arith.addf %6, %9 : vector<48x128xf32>
    %c0_8 = arith.constant 0 : index
    %c0_9 = arith.constant 0 : index
    %11 = vector.load %arg12[%c0_8, %c0_9] : memref<48x128xf32, #tpu.memory_space<vmem>>, vector<48x128xf32>
    tpu.vector_store %arg12[%c0_8, %c0_9], %10 {strides = array<i32>} : memref<48x128xf32, #tpu.memory_space<vmem>>, vector<48x128xf32>,
    %c0_10 = arith.constant 0 : index
    %c0_11 = arith.constant 0 : index
    %12 = vector.load %arg11[%c0_10, %c0_11] : memref<16x128xf32, #tpu.memory_space<vmem>>, vector<16x128xf32>
    %c0_12 = arith.constant 0 : index
    %c0_13 = arith.constant 0 : index
    %13 = vector.load %arg13[%c0_12, %c0_13] : memref<16x128xf32, #tpu.memory_space<vmem>>, vector<16x128xf32>
    tpu.vector_store %arg13[%c0_12, %c0_13], %12 {strides = array<i32>} : memref<16x128xf32, #tpu.memory_space<vmem>>, vector<16x128xf32>,
    %cst_14 = arith.constant 0.000000e+00 : f32
    %14 = vector.broadcast %cst_14 : f32 to vector<16x128xf32>
    %c0_15 = arith.constant 0 : index
    %c0_16 = arith.constant 0 : index
    %15 = vector.load %arg14[%c0_15, %c0_16] : memref<16x128xf32, #tpu.memory_space<vmem>>, vector<16x128xf32>
    tpu.vector_store %arg14[%c0_15, %c0_16], %14 {strides = array<i32>} : memref<16x128xf32, #tpu.memory_space<vmem>>, vector<16x128xf32>,
    %cst_17 = arith.constant 0.000000e+00 : f32
    %16 = vector.broadcast %cst_17 : f32 to vector<16x128xf32>
    %c0_18 = arith.constant 0 : index
    %c0_19 = arith.constant 0 : index
    %17 = vector.load %arg15[%c0_18, %c0_19] : memref<16x128xf32, #tpu.memory_space<vmem>>, vector<16x128xf32>
    tpu.vector_store %arg15[%c0_18, %c0_19], %16 {strides = array<i32>} : memref<16x128xf32, #tpu.memory_space<vmem>>, vector<16x128xf32>,
    %cst_20 = arith.constant 0.000000e+00 : f32
    %18 = vector.broadcast %cst_20 : f32 to vector<16x128xf32>
    %c0_21 = arith.constant 0 : index
    %c0_22 = arith.constant 0 : index
    %19 = vector.load %arg16[%c0_21, %c0_22] : memref<16x128xf32, #tpu.memory_space<vmem>>, vector<16x128xf32>
    tpu.vector_store %arg16[%c0_21, %c0_22], %18 {strides = array<i32>} : memref<16x128xf32, #tpu.memory_space<vmem>>, vector<16x128xf32>,
    %c0_i32_23 = arith.constant 0 : i32
    %c12_i32 = arith.constant 12 : i32
    %20 = arith.addi %c0_i32_23, %c12_i32 : i32
    %c1_i32 = arith.constant 1 : i32
    scf.for %arg17 = %c0_i32_23 to %20 step %c1_i32  : i32 {
      %c4_i32 = arith.constant 4 : i32
      %47 = arith.muli %arg17, %c4_i32 : i32
      %c0_i32_50 = arith.constant 0 : i32
      %48 = arith.addi %47, %c0_i32_50 : i32
      %49 = arith.index_cast %48 : i32 to index
      %50 = memref.load %arg1[%49] : memref<48xi32, #tpu.memory_space<smem>>
      %51 = arith.index_cast %48 : i32 to index
      %52 = memref.load %arg2[%51] : memref<48xi32, #tpu.memory_space<smem>>
      %53 = arith.index_cast %50 : i32 to index
      %c0_51 = arith.constant 0 : index
      %54 = vector.load %arg11[%53, %c0_51] : memref<16x128xf32, #tpu.memory_space<vmem>>, vector<1x128xf32>
      %55 = arith.index_cast %48 : i32 to index
      %c0_52 = arith.constant 0 : index
      %56 = vector.load %arg12[%55, %c0_52] : memref<48x128xf32, #tpu.memory_space<vmem>>, vector<1x128xf32>
      %57 = arith.addf %54, %56 : vector<1x128xf32>
      %cst_53 = arith.constant 0.000000e+00 : f32
      %58 = vector.broadcast %cst_53 : f32 to vector<1x128xf32>
      %59 = arith.maximumf %57, %58 : vector<1x128xf32>
      %60 = arith.index_cast %52 : i32 to index
      %c0_54 = arith.constant 0 : index
      %61 = vector.load %arg13[%60, %c0_54] : memref<16x128xf32, #tpu.memory_space<vmem>>, vector<1x128xf32>
      %62 = arith.addf %61, %59 : vector<1x128xf32>
      %63 = arith.index_cast %52 : i32 to index
      %c0_55 = arith.constant 0 : index
      %64 = vector.load %arg13[%63, %c0_55] : memref<16x128xf32, #tpu.memory_space<vmem>>, vector<1x128xf32>
      tpu.vector_store %arg13[%63, %c0_55], %62 {strides = array<i32>} : memref<16x128xf32, #tpu.memory_space<vmem>>, vector<1x128xf32>,
      %c1_i32_56 = arith.constant 1 : i32
      %65 = arith.addi %47, %c1_i32_56 : i32
      %66 = arith.index_cast %65 : i32 to index
      %67 = memref.load %arg1[%66] : memref<48xi32, #tpu.memory_space<smem>>
      %68 = arith.index_cast %65 : i32 to index
      %69 = memref.load %arg2[%68] : memref<48xi32, #tpu.memory_space<smem>>
      %70 = arith.index_cast %67 : i32 to index
      %c0_57 = arith.constant 0 : index
      %71 = vector.load %arg11[%70, %c0_57] : memref<16x128xf32, #tpu.memory_space<vmem>>, vector<1x128xf32>
      %72 = arith.index_cast %65 : i32 to index
      %c0_58 = arith.constant 0 : index
      %73 = vector.load %arg12[%72, %c0_58] : memref<48x128xf32, #tpu.memory_space<vmem>>, vector<1x128xf32>
      %74 = arith.addf %71, %73 : vector<1x128xf32>
      %cst_59 = arith.constant 0.000000e+00 : f32
      %75 = vector.broadcast %cst_59 : f32 to vector<1x128xf32>
      %76 = arith.maximumf %74, %75 : vector<1x128xf32>
      %77 = arith.index_cast %69 : i32 to index
      %c0_60 = arith.constant 0 : index
      %78 = vector.load %arg14[%77, %c0_60] : memref<16x128xf32, #tpu.memory_space<vmem>>, vector<1x128xf32>
      %79 = arith.addf %78, %76 : vector<1x128xf32>
      %80 = arith.index_cast %69 : i32 to index
      %c0_61 = arith.constant 0 : index
      %81 = vector.load %arg14[%80, %c0_61] : memref<16x128xf32, #tpu.memory_space<vmem>>, vector<1x128xf32>
      tpu.vector_store %arg14[%80, %c0_61], %79 {strides = array<i32>} : memref<16x128xf32, #tpu.memory_space<vmem>>, vector<1x128xf32>,
      %c2_i32 = arith.constant 2 : i32
      %82 = arith.addi %47, %c2_i32 : i32
      %83 = arith.index_cast %82 : i32 to index
      %84 = memref.load %arg1[%83] : memref<48xi32, #tpu.memory_space<smem>>
      %85 = arith.index_cast %82 : i32 to index
      %86 = memref.load %arg2[%85] : memref<48xi32, #tpu.memory_space<smem>>
      %87 = arith.index_cast %84 : i32 to index
      %c0_62 = arith.constant 0 : index
      %88 = vector.load %arg11[%87, %c0_62] : memref<16x128xf32, #tpu.memory_space<vmem>>, vector<1x128xf32>
      %89 = arith.index_cast %82 : i32 to index
      %c0_63 = arith.constant 0 : index
      %90 = vector.load %arg12[%89, %c0_63] : memref<48x128xf32, #tpu.memory_space<vmem>>, vector<1x128xf32>
      %91 = arith.addf %88, %90 : vector<1x128xf32>
      %cst_64 = arith.constant 0.000000e+00 : f32
      %92 = vector.broadcast %cst_64 : f32 to vector<1x128xf32>
      %93 = arith.maximumf %91, %92 : vector<1x128xf32>
      %94 = arith.index_cast %86 : i32 to index
      %c0_65 = arith.constant 0 : index
      %95 = vector.load %arg15[%94, %c0_65] : memref<16x128xf32, #tpu.memory_space<vmem>>, vector<1x128xf32>
      %96 = arith.addf %95, %93 : vector<1x128xf32>
      %97 = arith.index_cast %86 : i32 to index
      %c0_66 = arith.constant 0 : index
      %98 = vector.load %arg15[%97, %c0_66] : memref<16x128xf32, #tpu.memory_space<vmem>>, vector<1x128xf32>
      tpu.vector_store %arg15[%97, %c0_66], %96 {strides = array<i32>} : memref<16x128xf32, #tpu.memory_space<vmem>>, vector<1x128xf32>,
      %c3_i32 = arith.constant 3 : i32
      %99 = arith.addi %47, %c3_i32 : i32
      %100 = arith.index_cast %99 : i32 to index
      %101 = memref.load %arg1[%100] : memref<48xi32, #tpu.memory_space<smem>>
      %102 = arith.index_cast %99 : i32 to index
      %103 = memref.load %arg2[%102] : memref<48xi32, #tpu.memory_space<smem>>
      %104 = arith.index_cast %101 : i32 to index
      %c0_67 = arith.constant 0 : index
      %105 = vector.load %arg11[%104, %c0_67] : memref<16x128xf32, #tpu.memory_space<vmem>>, vector<1x128xf32>
      %106 = arith.index_cast %99 : i32 to index
      %c0_68 = arith.constant 0 : index
      %107 = vector.load %arg12[%106, %c0_68] : memref<48x128xf32, #tpu.memory_space<vmem>>, vector<1x128xf32>
      %108 = arith.addf %105, %107 : vector<1x128xf32>
      %cst_69 = arith.constant 0.000000e+00 : f32
      %109 = vector.broadcast %cst_69 : f32 to vector<1x128xf32>
      %110 = arith.maximumf %108, %109 : vector<1x128xf32>
      %111 = arith.index_cast %103 : i32 to index
      %c0_70 = arith.constant 0 : index
      %112 = vector.load %arg16[%111, %c0_70] : memref<16x128xf32, #tpu.memory_space<vmem>>, vector<1x128xf32>
      %113 = arith.addf %112, %110 : vector<1x128xf32>
      %114 = arith.index_cast %103 : i32 to index
      %c0_71 = arith.constant 0 : index
      %115 = vector.load %arg16[%114, %c0_71] : memref<16x128xf32, #tpu.memory_space<vmem>>, vector<1x128xf32>
      tpu.vector_store %arg16[%114, %c0_71], %113 {strides = array<i32>} : memref<16x128xf32, #tpu.memory_space<vmem>>, vector<1x128xf32>,
    }
    %c12_i32_24 = arith.constant 12 : i32
    %c0_25 = arith.constant 0 : index
    %c0_26 = arith.constant 0 : index
    %21 = vector.load %arg13[%c0_25, %c0_26] : memref<16x128xf32, #tpu.memory_space<vmem>>, vector<16x128xf32>
    %c0_27 = arith.constant 0 : index
    %c0_28 = arith.constant 0 : index
    %22 = vector.load %arg14[%c0_27, %c0_28] : memref<16x128xf32, #tpu.memory_space<vmem>>, vector<16x128xf32>
    %23 = arith.addf %21, %22 : vector<16x128xf32>
    %c0_29 = arith.constant 0 : index
    %c0_30 = arith.constant 0 : index
    %24 = vector.load %arg15[%c0_29, %c0_30] : memref<16x128xf32, #tpu.memory_space<vmem>>, vector<16x128xf32>
    %25 = arith.addf %23, %24 : vector<16x128xf32>
    %c0_31 = arith.constant 0 : index
    %c0_32 = arith.constant 0 : index
    %26 = vector.load %arg16[%c0_31, %c0_32] : memref<16x128xf32, #tpu.memory_space<vmem>>, vector<16x128xf32>
    %27 = arith.addf %25, %26 : vector<16x128xf32>
    %28 = arith.truncf %27 : vector<16x128xf32> to vector<16x128xbf16>
    %c0_33 = arith.constant 0 : index
    %c0_34 = arith.constant 0 : index
    %c0_35 = arith.constant 0 : index
    %29 = vector.load %arg7[%c0_33, %c0_34, %c0_35] : memref<1x128x128xbf16, #tpu.memory_space<vmem>>, vector<1x128x128xbf16>
    %30 = vector.shape_cast %29 : vector<1x128x128xbf16> to vector<128x128xbf16>
    %cst_36 = arith.constant dense<0.000000e+00> : vector<16x128xf32>
    %31 = tpu.matmul %28, %30, %cst_36 {dimension_numbers = #tpu.dot_dimension_numbers<[1], [0], [0], [1], [0, 0, 1, 1], [], []>} : vector<16x128xbf16>, vector<128x128xbf16>, vector<16x128xf32> -> vector<16x128xf32>
    %c0_37 = arith.constant 0 : index
    %c0_38 = arith.constant 0 : index
    %c0_39 = arith.constant 0 : index
    %32 = vector.load %arg8[%c0_37, %c0_38, %c0_39] : memref<1x1x128xf32, #tpu.memory_space<vmem>>, vector<1x1x128xf32>
    %33 = vector.shape_cast %32 : vector<1x1x128xf32> to vector<1x128xf32>
    %34 = vector.broadcast %33 : vector<1x128xf32> to vector<16x128xf32>
    %35 = arith.addf %31, %34 : vector<16x128xf32>
    %cst_40 = arith.constant 0.000000e+00 : f32
    %36 = vector.broadcast %cst_40 : f32 to vector<16x128xf32>
    %37 = arith.maximumf %35, %36 : vector<16x128xf32>
    %38 = arith.truncf %37 : vector<16x128xf32> to vector<16x128xbf16>
    %c0_41 = arith.constant 0 : index
    %c0_42 = arith.constant 0 : index
    %c0_43 = arith.constant 0 : index
    %39 = vector.load %arg9[%c0_41, %c0_42, %c0_43] : memref<1x128x128xbf16, #tpu.memory_space<vmem>>, vector<1x128x128xbf16>
    %40 = vector.shape_cast %39 : vector<1x128x128xbf16> to vector<128x128xbf16>
    %cst_44 = arith.constant dense<0.000000e+00> : vector<16x128xf32>
    %41 = tpu.matmul %38, %40, %cst_44 {dimension_numbers = #tpu.dot_dimension_numbers<[1], [0], [0], [1], [0, 0, 1, 1], [], []>} : vector<16x128xbf16>, vector<128x128xbf16>, vector<16x128xf32> -> vector<16x128xf32>
    %c0_45 = arith.constant 0 : index
    %c0_46 = arith.constant 0 : index
    %c0_47 = arith.constant 0 : index
    %42 = vector.load %arg10[%c0_45, %c0_46, %c0_47] : memref<1x1x128xf32, #tpu.memory_space<vmem>>, vector<1x1x128xf32>
    %43 = vector.shape_cast %42 : vector<1x1x128xf32> to vector<1x128xf32>
    %44 = vector.broadcast %43 : vector<1x128xf32> to vector<16x128xf32>
    %45 = arith.addf %41, %44 : vector<16x128xf32>
    %c0_48 = arith.constant 0 : index
    %c0_49 = arith.constant 0 : index
    %46 = vector.load %arg11[%c0_48, %c0_49] : memref<16x128xf32, #tpu.memory_space<vmem>>, vector<16x128xf32>
    tpu.vector_store %arg11[%c0_48, %c0_49], %45 {strides = array<i32>} : memref<16x128xf32, #tpu.memory_space<vmem>>, vector<16x128xf32>,
    return
  }
  func.func @transform_0(%arg0: i32, %arg1: memref<48xi32, #tpu.memory_space<smem>>, %arg2: memref<48xi32, #tpu.memory_space<smem>>) -> (i32, i32) {
    %c0_i32 = arith.constant 0 : i32
    %c0_i32_0 = arith.constant 0 : i32
    %c0_i32_1 = arith.constant 0 : i32
    return %c0_i32, %c0_i32_0 : i32, i32
  }
  func.func @transform_1(%arg0: i32, %arg1: memref<48xi32, #tpu.memory_space<smem>>, %arg2: memref<48xi32, #tpu.memory_space<smem>>) -> (i32, i32) {
    %c0_i32 = arith.constant 0 : i32
    %c0_i32_0 = arith.constant 0 : i32
    %c0_i32_1 = arith.constant 0 : i32
    return %c0_i32, %c0_i32_0 : i32, i32
  }
  func.func @transform_2(%arg0: i32, %arg1: memref<48xi32, #tpu.memory_space<smem>>, %arg2: memref<48xi32, #tpu.memory_space<smem>>) -> (i32, i32, i32) {
    %c0_i32 = arith.constant 0 : i32
    %c0_i32_0 = arith.constant 0 : i32
    %c0_i32_1 = arith.constant 0 : i32
    return %arg0, %c0_i32, %c0_i32_0 : i32, i32, i32
  }
  func.func @transform_3(%arg0: i32, %arg1: memref<48xi32, #tpu.memory_space<smem>>, %arg2: memref<48xi32, #tpu.memory_space<smem>>) -> (i32, i32, i32) {
    %c0_i32 = arith.constant 0 : i32
    %c0_i32_0 = arith.constant 0 : i32
    %c0_i32_1 = arith.constant 0 : i32
    return %arg0, %c0_i32, %c0_i32_0 : i32, i32, i32
  }
  func.func @transform_4(%arg0: i32, %arg1: memref<48xi32, #tpu.memory_space<smem>>, %arg2: memref<48xi32, #tpu.memory_space<smem>>) -> (i32, i32, i32) {
    %c0_i32 = arith.constant 0 : i32
    %c0_i32_0 = arith.constant 0 : i32
    %c0_i32_1 = arith.constant 0 : i32
    return %arg0, %c0_i32, %c0_i32_0 : i32, i32, i32
  }
  func.func @transform_5(%arg0: i32, %arg1: memref<48xi32, #tpu.memory_space<smem>>, %arg2: memref<48xi32, #tpu.memory_space<smem>>) -> (i32, i32, i32) {
    %c0_i32 = arith.constant 0 : i32
    %c0_i32_0 = arith.constant 0 : i32
    %c0_i32_1 = arith.constant 0 : i32
    return %arg0, %c0_i32, %c0_i32_0 : i32, i32, i32
  }
  func.func @transform_6(%arg0: i32, %arg1: memref<48xi32, #tpu.memory_space<smem>>, %arg2: memref<48xi32, #tpu.memory_space<smem>>) -> (i32, i32, i32) {
    %c0_i32 = arith.constant 0 : i32
    %c0_i32_0 = arith.constant 0 : i32
    %c0_i32_1 = arith.constant 0 : i32
    return %arg0, %c0_i32, %c0_i32_0 : i32, i32, i32
  }
  func.func @transform_7(%arg0: i32, %arg1: memref<48xi32, #tpu.memory_space<smem>>, %arg2: memref<48xi32, #tpu.memory_space<smem>>) -> (i32, i32, i32) {
    %c0_i32 = arith.constant 0 : i32
    %c0_i32_0 = arith.constant 0 : i32
    %c0_i32_1 = arith.constant 0 : i32
    return %arg0, %c0_i32, %c0_i32_0 : i32, i32, i32
  }
  func.func @transform_8(%arg0: i32, %arg1: memref<48xi32, #tpu.memory_space<smem>>, %arg2: memref<48xi32, #tpu.memory_space<smem>>) -> (i32, i32) {
    %c0_i32 = arith.constant 0 : i32
    %c0_i32_0 = arith.constant 0 : i32
    %c0_i32_1 = arith.constant 0 : i32
    return %c0_i32, %c0_i32_0 : i32, i32
  }
}

</mosaic_0001>

<llo_original>
// kernel: tpu_custom_call.1
$region0: #{tpu_custom_call.1}
  #allocation0 [shape = 'u32[]', space=smem, size = 0x4, offset = 0x4, fixed_abs, tag = 'smem constant byte address 0x4 - core index']
  #allocation1 [shape = 'u32[144,128]{1,0:T(1,128)}', space=vmem, size = 0x12000, scoped, tag = 'internal scratch']
  #allocation2 [shape = 'f32[48,128]{1,0:T(8,128)}', space=vmem, size = 0x6000, scoped, tag = 'scratch operand']
  #allocation3 [shape = 'f32[16,128]{1,0:T(8,128)}', space=vmem, size = 0x2000, scoped, tag = 'scratch operand']
  #allocation4 [shape = 'f32[16,128]{1,0:T(8,128)}', space=vmem, size = 0x2000, scoped, tag = 'scratch operand']
  #allocation5 [shape = 'f32[16,128]{1,0:T(8,128)}', space=vmem, size = 0x2000, scoped, tag = 'scratch operand']
  #allocation6 [shape = 'f32[16,128]{1,0:T(8,128)}', space=vmem, size = 0x2000, scoped, tag = 'scratch operand']
  #allocation7 [shape = 's32[1]{0}', space=sflag, size = 0x4, scoped, tag = 'scoped memory for tpu_custom_call.1']
  #allocation8 [shape = 'u8[512]{0}', space=smem, size = 0x200, scoped, tag = 'prefetched SMEM operand 0']
  #allocation9 [shape = 'u8[512]{0}', space=smem, size = 0x200, scoped, tag = 'prefetched SMEM operand 1']
  %s0 = inlined_call_operand.hbm [shape: s32[48], index: 0, kind: input, shape index: {}]
  %s1 = inlined_call_operand.vmem [shape: s32[48], index: 1, kind: input, shape index: {}]
  %s2 = inlined_call_operand.hbm [shape: f32[16,128], index: 2, kind: input, shape index: {}]
  %s3 = inlined_call_operand.hbm [shape: bf16[48,128], index: 3, kind: input, shape index: {}]
  %s4 = inlined_call_operand.hbm [shape: bf16[2,128,128], index: 4, kind: input, shape index: {}]
  %s5 = inlined_call_operand.vmem [shape: f32[2,1,128], index: 5, kind: input, shape index: {}]
  %s6 = inlined_call_operand.hbm [shape: bf16[2,128,128], index: 6, kind: input, shape index: {}]
  %s7 = inlined_call_operand.vmem [shape: f32[2,1,128], index: 7, kind: input, shape index: {}]
  %s8 = inlined_call_operand.hbm [shape: bf16[2,128,128], index: 8, kind: input, shape index: {}]
  %s9 = inlined_call_operand.vmem [shape: f32[2,1,128], index: 9, kind: input, shape index: {}]
  %s10 = inlined_call_operand.hbm [shape: f32[16,128], index: 10, kind: output, shape index: {}]
  %s11 = sld [smem:[#allocation0]]
  $region96: #{tpu_custom_call.1} parent=0
    _
  %s13 = ssub.s32 1, %s11
  %s14 = scalar_select 0, %s13, %s11
  %16 = dma.hbm_to_smem %s0, 16, [#allocation8], [#allocation7]
  %s17 = sshll.u32 %s1, 4
  %s18 = int_to_ptr.vmem [resolvable:$true] %s17
  %20 = dma.vmem_to_smem %s18, 16, [#allocation9], [#allocation7]
  %21 = dma.done [#allocation7], 32
  %22 = sfence
  $region1: #{tpu_custom_call.1} parent=0
    #allocation10 [shape = 'u8[8192]{0}', space=vmem, size = 0x2000, scoped, tag = 'input window, operand 2, single buffered']
    #allocation11 [shape = 's32[2]{0}', space=sflag, size = 0x8, scoped, tag = 'scoped memory for tpu_custom_call.1']
    #allocation12 [shape = 's32[2]{0}', space=sflag, size = 0x8, scoped, tag = 'scoped memory for tpu_custom_call.1']
    #allocation13 [shape = 'u8[12288]{0}', space=vmem, size = 0x3000, scoped, tag = 'input window, operand 3, single buffered']
    #allocation14 [shape = 's32[1]{0}', space=sflag, size = 0x4, scoped, tag = 'scoped memory for tpu_custom_call.1']
    #allocation15 [shape = 'u8[65536]{0}', space=vmem, size = 0x10000, scoped, tag = 'input window, operand 4']
    #allocation16 [shape = 'u8[65536]{0}', space=vmem, size = 0x10000, scoped, tag = 'input window, operand 6']
    #allocation17 [shape = 'u8[65536]{0}', space=vmem, size = 0x10000, scoped, tag = 'input window, operand 8']
    #allocation18 [shape = 'u8[8192]{0}', space=vmem, size = 0x2000, scoped, tag = 'output window, operand 0, single buffered']
    %23 = vsyncpa [#allocation11], 0
    %24 = vsyncpa [#allocation14], 0
    %25 = vsyncpa [#allocation12], 0
    loop: start=0, step=1, limit=4
    $region2: #{tpu_custom_call.1} parent=1 // loop_pre_header
      _
    $region3: #{tpu_custom_call.1} parent=1 // loop_header
      %s27 = sphi 0, %s31
      %p28 = scmp.ge.s32.totalorder %s27, 4
      %s35 = sphi 0, %s35
      %s37 = sphi 0, %s35
      %s38 = sphi 0, %s37
      %s52 = sphi 0, %s38
      %s56 = sphi 0, %s56
      %s58 = sphi 0, %s56
      %s59 = sphi 0, %s58
      %s73 = sphi 0, %s59
      %s79 = sphi 0, %s81
      %s82 = sphi 0, %s79
      %s83 = sphi 0, %s82
      %s99 = sphi 0, %s83
      %s105 = sphi 0, %s107
      %s108 = sphi 0, %s105
      %s109 = sphi 0, %s108
      %s125 = sphi 0, %s109
      %s131 = sphi 0, %s133
      %s134 = sphi 0, %s131
      %s135 = sphi 0, %s134
      %s151 = sphi 0, %s135
      %s157 = sphi 0, %s159
      %s160 = sphi 0, %s157
      %s161 = sphi 0, %s160
      %s177 = sphi 0, %s161
      %s183 = sphi 0, %s185
      %s186 = sphi 0, %s183
      %s187 = sphi 0, %s186
      %s203 = sphi 0, %s187
      %s209 = sphi 0, %s211
      %s212 = sphi 0, %s209
      %s213 = sphi 0, %s212
      %s229 = sphi 0, %s213
      %s233 = sphi 0, %s233
      %s235 = sphi 0, %s233
      %s236 = sphi 0, %s235
      %s250 = sphi 0, %s236
    $region4: #{tpu_custom_call.1} parent=1 // loop_header_branch
      %30 = sbr.rel (%p28) target = $region8
    $region5: #{tpu_custom_call.1} parent=1 // loop_body
      %s32 = ssub.s32 %s27, 1
      %s33 = ssub.s32 %s27, 2
      %s34 = sadd.s32 %s27, 1
      %s36 = sadd.s32 %s35, 1
      %p39 = scmp.eq.s32.totalorder %s27, 1
      %p40 = scmp.ne.s32.totalorder %s35, %s37
      %p41 = scmp.eq.s32.totalorder %s27, 0
      %p42 = por %p40, %p41
      %p43 = scmp.ne.s32.totalorder %s35, %s37
      %p44 = scmp.eq.s32.totalorder %s32, 1
      %p45 = por %p43, %p44
      %p46 = scmp.ne.s32.totalorder %s37, %s38
      %p47 = scmp.eq.s32.totalorder %s32, 0
      %p48 = por %p46, %p47
      %p49 = scmp.ne.s32.totalorder %s37, %s38
      %p50 = scmp.eq.s32.totalorder %s33, 1
      %p51 = por %p49, %p50
      %p53 = scmp.ne.s32.totalorder %s38, %s52
      %p54 = scmp.eq.s32.totalorder %s33, 0
      %p55 = por %p53, %p54
      %s57 = sadd.s32 %s56, 1
      %p60 = scmp.eq.s32.totalorder %s27, 1
      %p61 = scmp.ne.s32.totalorder %s56, %s58
      %p62 = scmp.eq.s32.totalorder %s27, 0
      %p63 = por %p61, %p62
      %p64 = scmp.ne.s32.totalorder %s56, %s58
      %p65 = scmp.eq.s32.totalorder %s32, 1
      %p66 = por %p64, %p65
      %p67 = scmp.ne.s32.totalorder %s58, %s59
      %p68 = scmp.eq.s32.totalorder %s32, 0
      %p69 = por %p67, %p68
      %p70 = scmp.ne.s32.totalorder %s58, %s59
      %p71 = scmp.eq.s32.totalorder %s33, 1
      %p72 = por %p70, %p71
      %p74 = scmp.ne.s32.totalorder %s59, %s73
      %p75 = scmp.eq.s32.totalorder %s33, 0
      %p76 = por %p74, %p75
      %s77 = ssub.s32 %s27, %s34
      %p78 = scmp.eq.s32.totalorder %s77, 0
      %s80 = sadd.s32 %s79, 1
      %s81 = scalar_select %p78, %s79, %s80
      %p84 = pneg %p78
      %p85 = scmp.eq.s32.totalorder %s27, 1
      %p86 = por %p84, %p85
      %p87 = scmp.ne.s32.totalorder %s79, %s82
      %p88 = scmp.eq.s32.totalorder %s27, 0
      %p89 = por %p87, %p88
      %p90 = scmp.ne.s32.totalorder %s79, %s82
      %p91 = scmp.eq.s32.totalorder %s32, 1
      %p92 = por %p90, %p91
      %p93 = scmp.ne.s32.totalorder %s82, %s83
      %p94 = scmp.eq.s32.totalorder %s32, 0
      %p95 = por %p93, %p94
      %p96 = scmp.ne.s32.totalorder %s82, %s83
      %p97 = scmp.eq.s32.totalorder %s33, 1
      %p98 = por %p96, %p97
      %p100 = scmp.ne.s32.totalorder %s83, %s99
      %p101 = scmp.eq.s32.totalorder %s33, 0
      %p102 = por %p100, %p101
      %s103 = ssub.s32 %s27, %s34
      %p104 = scmp.eq.s32.totalorder %s103, 0
      %s106 = sadd.s32 %s105, 1
      %s107 = scalar_select %p104, %s105, %s106
      %p110 = pneg %p104
      %p111 = scmp.eq.s32.totalorder %s27, 1
      %p112 = por %p110, %p111
      %p113 = scmp.ne.s32.totalorder %s105, %s108
      %p114 = scmp.eq.s32.totalorder %s27, 0
      %p115 = por %p113, %p114
      %p116 = scmp.ne.s32.totalorder %s105, %s108
      %p117 = scmp.eq.s32.totalorder %s32, 1
      %p118 = por %p116, %p117
      %p119 = scmp.ne.s32.totalorder %s108, %s109
      %p120 = scmp.eq.s32.totalorder %s32, 0
      %p121 = por %p119, %p120
      %p122 = scmp.ne.s32.totalorder %s108, %s109
      %p123 = scmp.eq.s32.totalorder %s33, 1
      %p124 = por %p122, %p123
      %p126 = scmp.ne.s32.totalorder %s109, %s125
      %p127 = scmp.eq.s32.totalorder %s33, 0
      %p128 = por %p126, %p127
      %s129 = ssub.s32 %s27, %s34
      %p130 = scmp.eq.s32.totalorder %s129, 0
      %s132 = sadd.s32 %s131, 1
      %s133 = scalar_select %p130, %s131, %s132
      %p136 = pneg %p130
      %p137 = scmp.eq.s32.totalorder %s27, 1
      %p138 = por %p136, %p137
      %p139 = scmp.ne.s32.totalorder %s131, %s134
      %p140 = scmp.eq.s32.totalorder %s27, 0
      %p141 = por %p139, %p140
      %p142 = scmp.ne.s32.totalorder %s131, %s134
      %p143 = scmp.eq.s32.totalorder %s32, 1
      %p144 = por %p142, %p143
      %p145 = scmp.ne.s32.totalorder %s134, %s135
      %p146 = scmp.eq.s32.totalorder %s32, 0
      %p147 = por %p145, %p146
      %p148 = scmp.ne.s32.totalorder %s134, %s135
      %p149 = scmp.eq.s32.totalorder %s33, 1
      %p150 = por %p148, %p149
      %p152 = scmp.ne.s32.totalorder %s135, %s151
      %p153 = scmp.eq.s32.totalorder %s33, 0
      %p154 = por %p152, %p153
      %s155 = ssub.s32 %s27, %s34
      %p156 = scmp.eq.s32.totalorder %s155, 0
      %s158 = sadd.s32 %s157, 1
      %s159 = scalar_select %p156, %s157, %s158
      %p162 = pneg %p156
      %p163 = scmp.eq.s32.totalorder %s27, 1
      %p164 = por %p162, %p163
      %p165 = scmp.ne.s32.totalorder %s157, %s160
      %p166 = scmp.eq.s32.totalorder %s27, 0
      %p167 = por %p165, %p166
      %p168 = scmp.ne.s32.totalorder %s157, %s160
      %p169 = scmp.eq.s32.totalorder %s32, 1
      %p170 = por %p168, %p169
      %p171 = scmp.ne.s32.totalorder %s160, %s161
      %p172 = scmp.eq.s32.totalorder %s32, 0
      %p173 = por %p171, %p172
      %p174 = scmp.ne.s32.totalorder %s160, %s161
      %p175 = scmp.eq.s32.totalorder %s33, 1
      %p176 = por %p174, %p175
      %p178 = scmp.ne.s32.totalorder %s161, %s177
      %p179 = scmp.eq.s32.totalorder %s33, 0
      %p180 = por %p178, %p179
      %s181 = ssub.s32 %s27, %s34
      %p182 = scmp.eq.s32.totalorder %s181, 0
      %s184 = sadd.s32 %s183, 1
      %s185 = scalar_select %p182, %s183, %s184
      %p188 = pneg %p182
      %p189 = scmp.eq.s32.totalorder %s27, 1
      %p190 = por %p188, %p189
      %p191 = scmp.ne.s32.totalorder %s183, %s186
      %p192 = scmp.eq.s32.totalorder %s27, 0
      %p193 = por %p191, %p192
      %p194 = scmp.ne.s32.totalorder %s183, %s186
      %p195 = scmp.eq.s32.totalorder %s32, 1
      %p196 = por %p194, %p195
      %p197 = scmp.ne.s32.totalorder %s186, %s187
      %p198 = scmp.eq.s32.totalorder %s32, 0
      %p199 = por %p197, %p198
      %p200 = scmp.ne.s32.totalorder %s186, %s187
      %p201 = scmp.eq.s32.totalorder %s33, 1
      %p202 = por %p200, %p201
      %p204 = scmp.ne.s32.totalorder %s187, %s203
      %p205 = scmp.eq.s32.totalorder %s33, 0
      %p206 = por %p204, %p205
      %s207 = ssub.s32 %s27, %s34
      %p208 = scmp.eq.s32.totalorder %s207, 0
      %s210 = sadd.s32 %s209, 1
      %s211 = scalar_select %p208, %s209, %s210
      %p214 = pneg %p208
      %p215 = scmp.eq.s32.totalorder %s27, 1
      %p216 = por %p214, %p215
      %p217 = scmp.ne.s32.totalorder %s209, %s212
      %p218 = scmp.eq.s32.totalorder %s27, 0
      %p219 = por %p217, %p218
      %p220 = scmp.ne.s32.totalorder %s209, %s212
      %p221 = scmp.eq.s32.totalorder %s32, 1
      %p222 = por %p220, %p221
      %p223 = scmp.ne.s32.totalorder %s212, %s213
      %p224 = scmp.eq.s32.totalorder %s32, 0
      %p225 = por %p223, %p224
      %p226 = scmp.ne.s32.totalorder %s212, %s213
      %p227 = scmp.eq.s32.totalorder %s33, 1
      %p228 = por %p226, %p227
      %p230 = scmp.ne.s32.totalorder %s213, %s229
      %p231 = scmp.eq.s32.totalorder %s33, 0
      %p232 = por %p230, %p231
      %s234 = sadd.s32 %s233, 1
      %p237 = scmp.eq.s32.totalorder %s27, 1
      %p238 = scmp.ne.s32.totalorder %s233, %s235
      %p239 = scmp.eq.s32.totalorder %s27, 0
      %p240 = por %p238, %p239
      %p241 = scmp.ne.s32.totalorder %s233, %s235
      %p242 = scmp.eq.s32.totalorder %s32, 1
      %p243 = por %p241, %p242
      %p244 = scmp.ne.s32.totalorder %s235, %s236
      %p245 = scmp.eq.s32.totalorder %s32, 0
      %p246 = por %p244, %p245
      %p247 = scmp.ne.s32.totalorder %s235, %s236
      %p248 = scmp.eq.s32.totalorder %s33, 1
      %p249 = por %p247, %p248
      %p251 = scmp.ne.s32.totalorder %s236, %s250
      %p252 = scmp.eq.s32.totalorder %s33, 0
      %p253 = por %p251, %p252
      %p254 = scmp.le.s32.totalorder 1, %s27
      %p255 = scmp.lt.s32.totalorder %s27, 3
      %p256 = pnand %p254, %p255
      %p257 = pneg %p256
      // Predicated region
      $region9: #{tpu_custom_call.1} parent=5 // pred_check
        _
      $region10: #{tpu_custom_call.1} parent=5 // pred_check_branch
        %259 = sbr.rel (%p256) target = $region12
      $region11: #{tpu_custom_call.1} parent=5 // pred_region
        %s260 = ssub.s32 %s27, 1
        // Predicated region
        $region13: #{tpu_custom_call.1} parent=11 // pred_check
          %p261 = pneg %p48
        $region14: #{tpu_custom_call.1} parent=11 // pred_check_branch
          %263 = sbr.rel (%p261) target = $region16
        $region15: #{tpu_custom_call.1} parent=11 // pred_region
          %s265 = ssub.s32 256, 256
          %266 = vsyncadd [#allocation11], %s265
          %s267 = sshll.u32 [#allocation10], 4
          %s268 = int_to_ptr.vmem [resolvable:$true] %s267
          %273 = dma.hbm_to_vmem [thread:$0]  %s2, 256, %s268, [#allocation11], 128, 128, 8
        $region16: #{tpu_custom_call.1} parent=11 // pred_fallthru
          _
        // Predicated region
        $region17: #{tpu_custom_call.1} parent=11 // pred_check
          %p274 = pneg %p69
        $region18: #{tpu_custom_call.1} parent=11 // pred_check_branch
          %276 = sbr.rel (%p274) target = $region20
        $region19: #{tpu_custom_call.1} parent=11 // pred_region
          %s278 = ssub.s32 384, 384
          %279 = vsyncadd [#allocation14], %s278
          %s280 = sshll.u32 [#allocation13], 4
          %s281 = int_to_ptr.vmem [resolvable:$true] %s280
          %286 = dma.hbm_to_vmem [thread:$0]  %s3, 384, %s281, [#allocation14], 64, 64, 4
        $region20: #{tpu_custom_call.1} parent=11 // pred_fallthru
          _
      $region12: #{tpu_custom_call.1} parent=5 // pred_fallthru
        _
      %p287 = scmp.lt.s32.totalorder %s27, 2
      // Predicated region
      $region21: #{tpu_custom_call.1} parent=5 // pred_check
        %p288 = pneg %p287
      $region22: #{tpu_custom_call.1} parent=5 // pred_check_branch
        %290 = sbr.rel (%p288) target = $region24
      $region23: #{tpu_custom_call.1} parent=5 // pred_region
        // Predicated region
        $region25: #{tpu_custom_call.1} parent=23 // pred_check
          %p291 = pneg %p89
        $region26: #{tpu_custom_call.1} parent=23 // pred_check_branch
          %293 = sbr.rel (%p291) target = $region28
        $region27: #{tpu_custom_call.1} parent=23 // pred_region
          %s294 = sand.u32 %s27, 1
          %s295 = scalar_lea.sflag [#allocation11], %s294
          %s296 = sand.u32 %s79, 1
          %s297 = smul.addr %s296, 64
          %s298 = scalar_lea.vmem [#allocation15], %s297
          %s300 = ssub.s32 1024, 1024
          %301 = vsyncadd %s295, %s300
          %s302 = smul.addr %s27, 16
          %s303 = smul.addr %s302, 64
          %s304 = scalar_lea.hbm %s4, %s303
          %s305 = sshll.u32 %s298, 4
          %s306 = int_to_ptr.vmem [resolvable:$true] %s305
          %311 = dma.hbm_to_vmem [thread:$0]  %s304, 1024, %s306, %s295, 64, 64, 4
        $region28: #{tpu_custom_call.1} parent=23 // pred_fallthru
          _
        // Predicated region
        $region29: #{tpu_custom_call.1} parent=23 // pred_check
          %p312 = pneg %p115
        $region30: #{tpu_custom_call.1} parent=23 // pred_check_branch
          %314 = sbr.rel (%p312) target = $region32
        $region31: #{tpu_custom_call.1} parent=23 // pred_region
          %p315 = scmp.lt.s32.totalorder %s27, 1
          %s316 = scalar_select %p315, %s27, 1
          %s317 = scalar_lea.vmem %s5, %s316
        $region32: #{tpu_custom_call.1} parent=23 // pred_fallthru
          _
        // Predicated region
        $region33: #{tpu_custom_call.1} parent=23 // pred_check
          %p318 = pneg %p141
        $region34: #{tpu_custom_call.1} parent=23 // pred_check_branch
          %320 = sbr.rel (%p318) target = $region36
        $region35: #{tpu_custom_call.1} parent=23 // pred_region
          %s321 = sand.u32 %s27, 1
          %s322 = scalar_lea.sflag [#allocation11], %s321
          %s323 = sand.u32 %s131, 1
          %s324 = smul.addr %s323, 64
          %s325 = scalar_lea.vmem [#allocation16], %s324
          %s327 = ssub.s32 1024, 1024
          %328 = vsyncadd %s322, %s327
          %s329 = smul.addr %s27, 16
          %s330 = smul.addr %s329, 64
          %s331 = scalar_lea.hbm %s6, %s330
          %s332 = sshll.u32 %s325, 4
          %s333 = int_to_ptr.vmem [resolvable:$true] %s332
          %338 = dma.hbm_to_vmem [thread:$0]  %s331, 1024, %s333, %s322, 64, 64, 4
        $region36: #{tpu_custom_call.1} parent=23 // pred_fallthru
          _
        // Predicated region
        $region37: #{tpu_custom_call.1} parent=23 // pred_check
          %p339 = pneg %p167
        $region38: #{tpu_custom_call.1} parent=23 // pred_check_branch
          %341 = sbr.rel (%p339) target = $region40
        $region39: #{tpu_custom_call.1} parent=23 // pred_region
          %p342 = scmp.lt.s32.totalorder %s27, 1
          %s343 = scalar_select %p342, %s27, 1
          %s344 = scalar_lea.vmem %s7, %s343
        $region40: #{tpu_custom_call.1} parent=23 // pred_fallthru
          _
        // Predicated region
        $region41: #{tpu_custom_call.1} parent=23 // pred_check
          %p345 = pneg %p193
        $region42: #{tpu_custom_call.1} parent=23 // pred_check_branch
          %347 = sbr.rel (%p345) target = $region44
        $region43: #{tpu_custom_call.1} parent=23 // pred_region
          %s348 = sand.u32 %s27, 1
          %s349 = scalar_lea.sflag [#allocation11], %s348
          %s350 = sand.u32 %s183, 1
          %s351 = smul.addr %s350, 64
          %s352 = scalar_lea.vmem [#allocation17], %s351
          %s354 = ssub.s32 1024, 1024
          %355 = vsyncadd %s349, %s354
          %s356 = smul.addr %s27, 16
          %s357 = smul.addr %s356, 64
          %s358 = scalar_lea.hbm %s8, %s357
          %s359 = sshll.u32 %s352, 4
          %s360 = int_to_ptr.vmem [resolvable:$true] %s359
          %365 = dma.hbm_to_vmem [thread:$0]  %s358, 1024, %s360, %s349, 64, 64, 4
        $region44: #{tpu_custom_call.1} parent=23 // pred_fallthru
          _
        // Predicated region
        $region45: #{tpu_custom_call.1} parent=23 // pred_check
          %p366 = pneg %p219
        $region46: #{tpu_custom_call.1} parent=23 // pred_check_branch
          %368 = sbr.rel (%p366) target = $region48
        $region47: #{tpu_custom_call.1} parent=23 // pred_region
          %p369 = scmp.lt.s32.totalorder %s27, 1
          %s370 = scalar_select %p369, %s27, 1
          %s371 = scalar_lea.vmem %s9, %s370
        $region48: #{tpu_custom_call.1} parent=23 // pred_fallthru
          _
      $region24: #{tpu_custom_call.1} parent=5 // pred_fallthru
        _
      %p372 = scmp.le.s32.totalorder 1, %s27
      %p373 = scmp.lt.s32.totalorder %s27, 3
      %p374 = pnand %p372, %p373
      %p375 = pneg %p374
      // Predicated region
      $region49: #{tpu_custom_call.1} parent=5 // pred_check
        _
      $region50: #{tpu_custom_call.1} parent=5 // pred_check_branch
        %377 = sbr.rel (%p374) target = $region52
      $region51: #{tpu_custom_call.1} parent=5 // pred_region
        %s378 = ssub.s32 %s27, 1
        // Predicated region
        $region53: #{tpu_custom_call.1} parent=51 // pred_check
          %p379 = pneg %p48
        $region54: #{tpu_custom_call.1} parent=51 // pred_check_branch
          %381 = sbr.rel (%p379) target = $region56
        $region55: #{tpu_custom_call.1} parent=51 // pred_region
          %382 = dma.done [#allocation11], 256
        $region56: #{tpu_custom_call.1} parent=51 // pred_fallthru
          _
        // Predicated region
        $region57: #{tpu_custom_call.1} parent=51 // pred_check
          %p383 = pneg %p69
        $region58: #{tpu_custom_call.1} parent=51 // pred_check_branch
          %385 = sbr.rel (%p383) target = $region60
        $region59: #{tpu_custom_call.1} parent=51 // pred_region
          %386 = dma.done [#allocation14], 384
        $region60: #{tpu_custom_call.1} parent=51 // pred_fallthru
          _
        %s387 = sand.u32 %s32, 1
        %s388 = scalar_lea.sflag [#allocation11], %s387
        %s389 = sand.u32 %s82, 1
        %s390 = smul.addr %s389, 64
        %s391 = scalar_lea.vmem [#allocation15], %s390
        // Predicated region
        $region61: #{tpu_custom_call.1} parent=51 // pred_check
          %p392 = pneg %p95
        $region62: #{tpu_custom_call.1} parent=51 // pred_check_branch
          %394 = sbr.rel (%p392) target = $region64
        $region63: #{tpu_custom_call.1} parent=51 // pred_region
          %395 = dma.done %s388, 1024
        $region64: #{tpu_custom_call.1} parent=51 // pred_fallthru
          _
        %s396 = sand.u32 %s32, 1
        %s397 = scalar_lea.sflag [#allocation11], %s396
        %s398 = sand.u32 %s134, 1
        %s399 = smul.addr %s398, 64
        %s400 = scalar_lea.vmem [#allocation16], %s399
        // Predicated region
        $region65: #{tpu_custom_call.1} parent=51 // pred_check
          %p401 = pneg %p147
        $region66: #{tpu_custom_call.1} parent=51 // pred_check_branch
          %403 = sbr.rel (%p401) target = $region68
        $region67: #{tpu_custom_call.1} parent=51 // pred_region
          %404 = dma.done %s397, 1024
        $region68: #{tpu_custom_call.1} parent=51 // pred_fallthru
          _
        %s405 = sand.u32 %s32, 1
        %s406 = scalar_lea.sflag [#allocation11], %s405
        %s407 = sand.u32 %s186, 1
        %s408 = smul.addr %s407, 64
        %s409 = scalar_lea.vmem [#allocation17], %s408
        // Predicated region
        $region69: #{tpu_custom_call.1} parent=51 // pred_check
          %p410 = pneg %p199
        $region70: #{tpu_custom_call.1} parent=51 // pred_check_branch
          %412 = sbr.rel (%p410) target = $region72
        $region71: #{tpu_custom_call.1} parent=51 // pred_region
          %413 = dma.done %s406, 1024
        $region72: #{tpu_custom_call.1} parent=51 // pred_fallthru
          _
        %p414 = pneg %p48
        %p415 = pneg %p45
        %p416 = pneg %p69
        %p417 = pneg %p66
        %s418 = sand.u32 %s32, 1
        %s419 = scalar_lea.sflag [#allocation11], %s418
        %s420 = sand.u32 %s82, 1
        %s421 = smul.addr %s420, 64
        %s422 = scalar_lea.vmem [#allocation15], %s421
        %p423 = pneg %p95
        %p424 = pneg %p92
        %p425 = scmp.lt.s32.totalorder %s32, 1
        %s426 = scalar_select %p425, %s32, 1
        %s427 = scalar_lea.vmem %s5, %s426
        %p428 = pneg %p121
        %p429 = pneg %p118
        %s430 = sand.u32 %s32, 1
        %s431 = scalar_lea.sflag [#allocation11], %s430
        %s432 = sand.u32 %s134, 1
        %s433 = smul.addr %s432, 64
        %s434 = scalar_lea.vmem [#allocation16], %s433
        %p435 = pneg %p147
        %p436 = pneg %p144
        %p437 = scmp.lt.s32.totalorder %s32, 1
        %s438 = scalar_select %p437, %s32, 1
        %s439 = scalar_lea.vmem %s7, %s438
        %p440 = pneg %p173
        %p441 = pneg %p170
        %s442 = sand.u32 %s32, 1
        %s443 = scalar_lea.sflag [#allocation11], %s442
        %s444 = sand.u32 %s186, 1
        %s445 = smul.addr %s444, 64
        %s446 = scalar_lea.vmem [#allocation17], %s445
        %p447 = pneg %p199
        %p448 = pneg %p196
        %p449 = scmp.lt.s32.totalorder %s32, 1
        %s450 = scalar_select %p449, %s32, 1
        %s451 = scalar_lea.vmem %s9, %s450
        %p452 = pneg %p225
        %p453 = pneg %p222
        %p454 = pneg %p246
        %p455 = pneg %p243
        %p456 = scmp.lt.s32.totalorder %s32, 1
        %s457 = scalar_select %p456, %s32, 1
        %s458 = scalar_lea.vmem %s5, %s457
        %p459 = scmp.lt.s32.totalorder %s32, 1
        %s460 = scalar_select %p459, %s32, 1
        %s461 = scalar_lea.vmem %s7, %s460
        %p462 = scmp.lt.s32.totalorder %s32, 1
        %s463 = scalar_select %p462, %s32, 1
        %s464 = scalar_lea.vmem %s9, %s463
        %p466 = scmp.eq.s32.totalorder %s32, 0
        // Predicated region
        $region73: #{tpu_custom_call.1} parent=51 // pred_check
          %p467 = pneg %p466
        $region74: #{tpu_custom_call.1} parent=51 // pred_check_branch
          %469 = sbr.rel (%p467) target = $region76
        $region75: #{tpu_custom_call.1} parent=51 // pred_region
          %v470 = vld [vmem:[#allocation10] sm:$0xff]
          %v471 = vld [vmem:[#allocation10 + $0x8] sm:$0xff]
          %472 = vst [vmem:[#allocation18] sm:$0xff] %v470
          %473 = vst [vmem:[#allocation18 + $0x8] sm:$0xff] %v471
        $region76: #{tpu_custom_call.1} parent=51 // pred_fallthru
          _
        %v474 = vld [vmem:[#allocation13] sm:$0xf]
        %v475 = vld [vmem:[#allocation13 + $0x4] sm:$0xf]
        %v476 = vld [vmem:[#allocation13 + $0x8] sm:$0xf]
        %v477 = vld [vmem:[#allocation13 + $0xc] sm:$0xf]
        %v478 = vld [vmem:[#allocation13 + $0x10] sm:$0xf]
        %v479 = vld [vmem:[#allocation13 + $0x14] sm:$0xf]
        %v480 = vld [vmem:[%s391] sm:$0xf]
        %v481 = vld [vmem:[%s391 + $0x4] sm:$0xf]
        %v482 = vld [vmem:[%s391 + $0x8] sm:$0xf]
        %v483 = vld [vmem:[%s391 + $0xc] sm:$0xf]
        %v484 = vld [vmem:[%s391 + $0x10] sm:$0xf]
        %v485 = vld [vmem:[%s391 + $0x14] sm:$0xf]
        %v486 = vld [vmem:[%s391 + $0x18] sm:$0xf]
        %v487 = vld [vmem:[%s391 + $0x1c] sm:$0xf]
        %v488 = vld [vmem:[%s391 + $0x20] sm:$0xf]
        %v489 = vld [vmem:[%s391 + $0x24] sm:$0xf]
        %v490 = vld [vmem:[%s391 + $0x28] sm:$0xf]
        %v491 = vld [vmem:[%s391 + $0x2c] sm:$0xf]
        %v492 = vld [vmem:[%s391 + $0x30] sm:$0xf]
        %v493 = vld [vmem:[%s391 + $0x34] sm:$0xf]
        %v494 = vld [vmem:[%s391 + $0x38] sm:$0xf]
        %v495 = vld [vmem:[%s391 + $0x3c] sm:$0xf]
        %v496 = vld [vmem:[%s458] sm:$0x1]
        %v498 = vlaneseq
        %v499 = vshrl.u32 %v498, 7
        %v500 = vsub.s32 0, %v499
        %v501 = vrot.slane %v496, %v500
        %v509 = vunpack.c.l.b16 %v474
        %v510 = vunpack.c.l.b16 %v475
        %v511 = vunpack.c.l.b16 %v476
        %v512 = vunpack.c.l.b16 %v477
        %v513 = vunpack.c.l.b16 %v478
        %v514 = vunpack.c.l.b16 %v479
        %v515 = vpack.c.b16 %v510, %v509
        %v516 = vpack.c.b16 %v512, %v511
        %v517 = vpack.c.b16 %v514, %v513
        %v537 = vunpack.c.l.b16 %v480
        %v538 = vunpack.c.l.b16 %v481
        %v539 = vunpack.c.l.b16 %v482
        %v540 = vunpack.c.l.b16 %v483
        %v541 = vunpack.c.l.b16 %v484
        %v542 = vunpack.c.l.b16 %v485
        %v543 = vunpack.c.l.b16 %v486
        %v544 = vunpack.c.l.b16 %v487
        %v545 = vunpack.c.l.b16 %v488
        %v546 = vunpack.c.l.b16 %v489
        %v547 = vunpack.c.l.b16 %v490
        %v548 = vunpack.c.l.b16 %v491
        %v549 = vunpack.c.l.b16 %v492
        %v550 = vunpack.c.l.b16 %v493
        %v551 = vunpack.c.l.b16 %v494
        %v552 = vunpack.c.l.b16 %v495
        %v553 = vpack.c.b16 %v538, %v537
        %v554 = vpack.c.b16 %v540, %v539
        %v555 = vpack.c.b16 %v542, %v541
        %v556 = vpack.c.b16 %v544, %v543
        %v557 = vpack.c.b16 %v546, %v545
        %v558 = vpack.c.b16 %v548, %v547
        %v559 = vpack.c.b16 %v550, %v549
        %v560 = vpack.c.b16 %v552, %v551
        %569 = vmatprep.subr.bf16.mxu0 0
        %570 = vmatpush1.bf16.msra.mxu0 %v560
        %571 = vmatprep.subr.bf16.mxu0 0
        %572 = vmatpush1.bf16.msra.mxu0 %v559
        %573 = vmatprep.subr.bf16.mxu0 0
        %574 = vmatpush1.bf16.msra.mxu0 %v558
        %575 = vmatprep.subr.bf16.mxu0 0
        %576 = vmatpush1.bf16.msra.mxu0 %v557
        %577 = vmatprep.subr.bf16.mxu0 0
        %578 = vmatpush1.bf16.msra.mxu0 %v556
        %579 = vmatprep.subr.bf16.mxu0 0
        %580 = vmatpush1.bf16.msra.mxu0 %v555
        %581 = vmatprep.subr.bf16.mxu0 0
        %582 = vmatpush1.bf16.msra.mxu0 %v554
        %583 = vmatprep.subr.bf16.mxu0 0
        %584 = vmatpush1.bf16.msra.mxu0 %v553
        %585 = vmatprep.subr.bf16.mxu0 0
        %586 = vmatpush2.bf16.msra.mxu0 0
        %587 = vmatprep.subr.bf16.mxu0 0
        %588 = vmatpush2.bf16.msra.mxu0 0
        %589 = vmatprep.subr.bf16.mxu0 0
        %590 = vmatpush2.bf16.msra.mxu0 0
        %591 = vmatprep.subr.bf16.mxu0 0
        %592 = vmatpush2.bf16.msra.mxu0 0
        %593 = vmatprep.subr.bf16.mxu0 0
        %594 = vmatpush2.bf16.msra.mxu0 0
        %595 = vmatprep.subr.bf16.mxu0 0
        %596 = vmatpush2.bf16.msra.mxu0 0
        %597 = vmatprep.subr.bf16.mxu0 0
        %598 = vmatpush2.bf16.msra.mxu0 0
        %599 = vmatprep.subr.bf16.mxu0 0
        %600 = vmatpush2.bf16.msra.mxu0 0
        %601 = vmatprep.mubr.bf16.mxu0 0
        %602 = vmatmul.mubr.bf16.gmra.mxu0 %v515
        %v603 = vpop.f32.mrf.mxu0
        %v604 = vadd.f32 %v501, %v603
        %v605 = vpop.f32.mrf.mxu0
        %v606 = vpop.f32.mrf.mxu0
        %v607 = vadd.f32 %v501, %v606
        %v608 = vpop.f32.mrf.mxu0
        %609 = vmatprep.mubr.bf16.mxu0 0
        %610 = vmatmul.mubr.bf16.gmra.mxu0 %v516
        %v611 = vpop.f32.mrf.mxu0
        %v612 = vadd.f32 %v501, %v611
        %v613 = vpop.f32.mrf.mxu0
        %v614 = vpop.f32.mrf.mxu0
        %v615 = vadd.f32 %v501, %v614
        %v616 = vpop.f32.mrf.mxu0
        %617 = vmatprep.mubr.bf16.mxu0 0
        %618 = vmatmul.mubr.bf16.gmra.mxu0 %v517
        %v619 = vpop.f32.mrf.mxu0
        %v620 = vadd.f32 %v501, %v619
        %v621 = vpop.f32.mrf.mxu0
        %v622 = vpop.f32.mrf.mxu0
        %v623 = vadd.f32 %v501, %v622
        %v624 = vpop.f32.mrf.mxu0
        %625 = vdwg.mxu0
        %626 = vst [vmem:[#allocation2] sm:$0xff] %v604
        %627 = vst [vmem:[#allocation2 + $0x8] sm:$0xff] %v607
        %628 = vst [vmem:[#allocation2 + $0x10] sm:$0xff] %v612
        %629 = vst [vmem:[#allocation2 + $0x18] sm:$0xff] %v615
        %630 = vst [vmem:[#allocation2 + $0x20] sm:$0xff] %v620
        %631 = vst [vmem:[#allocation2 + $0x28] sm:$0xff] %v623
        %v632 = vld [vmem:[#allocation18] sm:$0xff]
        %v633 = vld [vmem:[#allocation18 + $0x8] sm:$0xff]
        %634 = vst [vmem:[#allocation3] sm:$0xff] %v632
        %635 = vst [vmem:[#allocation3 + $0x8] sm:$0xff] %v633
        %636 = vst [vmem:[#allocation4] sm:$0xff] 0.0
        %637 = vst [vmem:[#allocation4 + $0x8] sm:$0xff] 0.0
        %638 = vst [vmem:[#allocation5] sm:$0xff] 0.0
        %639 = vst [vmem:[#allocation5 + $0x8] sm:$0xff] 0.0
        %640 = vst [vmem:[#allocation6] sm:$0xff] 0.0
        %641 = vst [vmem:[#allocation6 + $0x8] sm:$0xff] 0.0
        loop: start=0, step=1, limit=12
        $region77: #{tpu_custom_call.1} parent=51 // loop_pre_header
          _
        $region78: #{tpu_custom_call.1} parent=51 // loop_header
          %s643 = sphi 0, %s647
          %p644 = scmp.ge.s32.totalorder %s643, 12
        $region79: #{tpu_custom_call.1} parent=51 // loop_header_branch
          %646 = sbr.rel (%p644) target = $region83
        $region80: #{tpu_custom_call.1} parent=51 // loop_body
          %s648 = smul.u32 %s643, 4
          %s649 = sld [smem:[#allocation8 + %s648]]
          %s650 = sld [smem:[#allocation9 + %s648]]
          %s651 = scalar_lea.vmem [#allocation18], %s649
          %v652 = vld [vmem:[%s651] sm:$0x1]
          %s653 = scalar_lea.vmem [#allocation2], %s648
          %v654 = vld [vmem:[%s653] sm:$0x1]
          %v655 = vadd.f32 %v652, %v654
          %v656 = vmax.f32 %v655, 0.0
          %s657 = scalar_lea.vmem [#allocation3], %s650
          %v658 = vld [vmem:[%s657] sm:$0x1]
          %v659 = vadd.f32 %v658, %v656
          %660 = vst [vmem:[%s657] sm:$0x1] %v659
          %s661 = sadd.s32 %s648, 1
          %s662 = sld [smem:[#allocation8 + %s661]]
          %s663 = sld [smem:[#allocation9 + %s661]]
          %s664 = scalar_lea.vmem [#allocation18], %s662
          %v665 = vld [vmem:[%s664] sm:$0x1]
          %s666 = scalar_lea.vmem [#allocation2], %s661
          %v667 = vld [vmem:[%s666] sm:$0x1]
          %v668 = vadd.f32 %v665, %v667
          %v669 = vmax.f32 %v668, 0.0
          %s670 = scalar_lea.vmem [#allocation4], %s663
          %v671 = vld [vmem:[%s670] sm:$0x1]
          %v672 = vadd.f32 %v671, %v669
          %673 = vst [vmem:[%s670] sm:$0x1] %v672
          %s674 = sadd.s32 %s648, 2
          %s675 = sld [smem:[#allocation8 + %s674]]
          %s676 = sld [smem:[#allocation9 + %s674]]
          %s677 = scalar_lea.vmem [#allocation18], %s675
          %v678 = vld [vmem:[%s677] sm:$0x1]
          %s679 = scalar_lea.vmem [#allocation2], %s674
          %v680 = vld [vmem:[%s679] sm:$0x1]
          %v681 = vadd.f32 %v678, %v680
          %v682 = vmax.f32 %v681, 0.0
          %s683 = scalar_lea.vmem [#allocation5], %s676
          %v684 = vld [vmem:[%s683] sm:$0x1]
          %v685 = vadd.f32 %v684, %v682
          %686 = vst [vmem:[%s683] sm:$0x1] %v685
          %s687 = sadd.s32 %s648, 3
          %s688 = sld [smem:[#allocation8 + %s687]]
          %s689 = sld [smem:[#allocation9 + %s687]]
          %s690 = scalar_lea.vmem [#allocation18], %s688
          %v691 = vld [vmem:[%s690] sm:$0x1]
          %s692 = scalar_lea.vmem [#allocation2], %s687
          %v693 = vld [vmem:[%s692] sm:$0x1]
          %v694 = vadd.f32 %v691, %v693
          %v695 = vmax.f32 %v694, 0.0
          %s696 = scalar_lea.vmem [#allocation6], %s689
          %v697 = vld [vmem:[%s696] sm:$0x1]
          %v698 = vadd.f32 %v697, %v695
          %699 = vst [vmem:[%s696] sm:$0x1] %v698
        $region81: #{tpu_custom_call.1} parent=51 // loop_footer
          %s647 = sadd.s32 1, %s643
        $region82: #{tpu_custom_call.1} parent=51 // loop_footer_branch
          %642 = sbr.rel target = $region78
        $region83: #{tpu_custom_call.1} parent=51 // loop_exit
          _
        %v700 = vld [vmem:[#allocation3] sm:$0xff]
        %v701 = vld [vmem:[#allocation3 + $0x8] sm:$0xff]
        %v702 = vld [vmem:[#allocation4] sm:$0xff]
        %v703 = vld [vmem:[#allocation4 + $0x8] sm:$0xff]
        %v704 = vadd.f32 %v700, %v702
        %v705 = vadd.f32 %v701, %v703
        %v706 = vld [vmem:[#allocation5] sm:$0xff]
        %v707 = vld [vmem:[#allocation5 + $0x8] sm:$0xff]
        %v708 = vadd.f32 %v704, %v706
        %v709 = vadd.f32 %v705, %v707
        %v710 = vld [vmem:[#allocation6] sm:$0xff]
        %v711 = vld [vmem:[#allocation6 + $0x8] sm:$0xff]
        %v712 = vadd.f32 %v708, %v710
        %v713 = vadd.f32 %v709, %v711
        %v714 = vpack.c.bf16 %v713, %v712
        %v715 = vld [vmem:[%s400] sm:$0xf]
        %v716 = vld [vmem:[%s400 + $0x4] sm:$0xf]
        %v717 = vld [vmem:[%s400 + $0x8] sm:$0xf]
        %v718 = vld [vmem:[%s400 + $0xc] sm:$0xf]
        %v719 = vld [vmem:[%s400 + $0x10] sm:$0xf]
        %v720 = vld [vmem:[%s400 + $0x14] sm:$0xf]
        %v721 = vld [vmem:[%s400 + $0x18] sm:$0xf]
        %v722 = vld [vmem:[%s400 + $0x1c] sm:$0xf]
        %v723 = vld [vmem:[%s400 + $0x20] sm:$0xf]
        %v724 = vld [vmem:[%s400 + $0x24] sm:$0xf]
        %v725 = vld [vmem:[%s400 + $0x28] sm:$0xf]
        %v726 = vld [vmem:[%s400 + $0x2c] sm:$0xf]
        %v727 = vld [vmem:[%s400 + $0x30] sm:$0xf]
        %v728 = vld [vmem:[%s400 + $0x34] sm:$0xf]
        %v729 = vld [vmem:[%s400 + $0x38] sm:$0xf]
        %v730 = vld [vmem:[%s400 + $0x3c] sm:$0xf]
        %v731 = vld [vmem:[%s461] sm:$0x1]
        %v733 = vlaneseq
        %v734 = vshrl.u32 %v733, 7
        %v735 = vsub.s32 0, %v734
        %v736 = vrot.slane %v731, %v735
        %v754 = vunpack.c.l.b16 %v715
        %v755 = vunpack.c.l.b16 %v716
        %v756 = vunpack.c.l.b16 %v717
        %v757 = vunpack.c.l.b16 %v718
        %v758 = vunpack.c.l.b16 %v719
        %v759 = vunpack.c.l.b16 %v720
        %v760 = vunpack.c.l.b16 %v721
        %v761 = vunpack.c.l.b16 %v722
        %v762 = vunpack.c.l.b16 %v723
        %v763 = vunpack.c.l.b16 %v724
        %v764 = vunpack.c.l.b16 %v725
        %v765 = vunpack.c.l.b16 %v726
        %v766 = vunpack.c.l.b16 %v727
        %v767 = vunpack.c.l.b16 %v728
        %v768 = vunpack.c.l.b16 %v729
        %v769 = vunpack.c.l.b16 %v730
        %v770 = vpack.c.b16 %v755, %v754
        %v771 = vpack.c.b16 %v757, %v756
        %v772 = vpack.c.b16 %v759, %v758
        %v773 = vpack.c.b16 %v761, %v760
        %v774 = vpack.c.b16 %v763, %v762
        %v775 = vpack.c.b16 %v765, %v764
        %v776 = vpack.c.b16 %v767, %v766
        %v777 = vpack.c.b16 %v769, %v768
        %786 = vmatprep.subr.bf16.mxu0 0
        %787 = vmatpush1.bf16.msra.mxu0 %v777
        %788 = vmatprep.subr.bf16.mxu0 0
        %789 = vmatpush1.bf16.msra.mxu0 %v776
        %790 = vmatprep.subr.bf16.mxu0 0
        %791 = vmatpush1.bf16.msra.mxu0 %v775
        %792 = vmatprep.subr.bf16.mxu0 0
        %793 = vmatpush1.bf16.msra.mxu0 %v774
        %794 = vmatprep.subr.bf16.mxu0 0
        %795 = vmatpush1.bf16.msra.mxu0 %v773
        %796 = vmatprep.subr.bf16.mxu0 0
        %797 = vmatpush1.bf16.msra.mxu0 %v772
        %798 = vmatprep.subr.bf16.mxu0 0
        %799 = vmatpush1.bf16.msra.mxu0 %v771
        %800 = vmatprep.subr.bf16.mxu0 0
        %801 = vmatpush1.bf16.msra.mxu0 %v770
        %802 = vmatprep.subr.bf16.mxu0 0
        %803 = vmatpush2.bf16.msra.mxu0 0
        %804 = vmatprep.subr.bf16.mxu0 0
        %805 = vmatpush2.bf16.msra.mxu0 0
        %806 = vmatprep.subr.bf16.mxu0 0
        %807 = vmatpush2.bf16.msra.mxu0 0
        %808 = vmatprep.subr.bf16.mxu0 0
        %809 = vmatpush2.bf16.msra.mxu0 0
        %810 = vmatprep.subr.bf16.mxu0 0
        %811 = vmatpush2.bf16.msra.mxu0 0
        %812 = vmatprep.subr.bf16.mxu0 0
        %813 = vmatpush2.bf16.msra.mxu0 0
        %814 = vmatprep.subr.bf16.mxu0 0
        %815 = vmatpush2.bf16.msra.mxu0 0
        %816 = vmatprep.subr.bf16.mxu0 0
        %817 = vmatpush2.bf16.msra.mxu0 0
        %818 = vmatprep.mubr.bf16.mxu0 0
        %819 = vmatmul.mubr.bf16.gmra.mxu0 %v714
        %v820 = vpop.f32.mrf.mxu0
        %v821 = vadd.f32 %v736, %v820
        %v822 = vpop.f32.mrf.mxu0
        %v823 = vpop.f32.mrf.mxu0
        %v824 = vadd.f32 %v736, %v823
        %v825 = vpop.f32.mrf.mxu0
        %826 = vdwg.mxu0
        %v827 = vmax.f32 %v821, 0.0
        %v828 = vmax.f32 %v824, 0.0
        %v829 = vpack.c.bf16 %v828, %v827
        %v830 = vld [vmem:[%s409] sm:$0xf]
        %v831 = vld [vmem:[%s409 + $0x4] sm:$0xf]
        %v832 = vld [vmem:[%s409 + $0x8] sm:$0xf]
        %v833 = vld [vmem:[%s409 + $0xc] sm:$0xf]
        %v834 = vld [vmem:[%s409 + $0x10] sm:$0xf]
        %v835 = vld [vmem:[%s409 + $0x14] sm:$0xf]
        %v836 = vld [vmem:[%s409 + $0x18] sm:$0xf]
        %v837 = vld [vmem:[%s409 + $0x1c] sm:$0xf]
        %v838 = vld [vmem:[%s409 + $0x20] sm:$0xf]
        %v839 = vld [vmem:[%s409 + $0x24] sm:$0xf]
        %v840 = vld [vmem:[%s409 + $0x28] sm:$0xf]
        %v841 = vld [vmem:[%s409 + $0x2c] sm:$0xf]
        %v842 = vld [vmem:[%s409 + $0x30] sm:$0xf]
        %v843 = vld [vmem:[%s409 + $0x34] sm:$0xf]
        %v844 = vld [vmem:[%s409 + $0x38] sm:$0xf]
        %v845 = vld [vmem:[%s409 + $0x3c] sm:$0xf]
        %v846 = vld [vmem:[%s464] sm:$0x1]
        %v848 = vlaneseq
        %v849 = vshrl.u32 %v848, 7
        %v850 = vsub.s32 0, %v849
        %v851 = vrot.slane %v846, %v850
        %v869 = vunpack.c.l.b16 %v830
        %v870 = vunpack.c.l.b16 %v831
        %v871 = vunpack.c.l.b16 %v832
        %v872 = vunpack.c.l.b16 %v833
        %v873 = vunpack.c.l.b16 %v834
        %v874 = vunpack.c.l.b16 %v835
        %v875 = vunpack.c.l.b16 %v836
        %v876 = vunpack.c.l.b16 %v837
        %v877 = vunpack.c.l.b16 %v838
        %v878 = vunpack.c.l.b16 %v839
        %v879 = vunpack.c.l.b16 %v840
        %v880 = vunpack.c.l.b16 %v841
        %v881 = vunpack.c.l.b16 %v842
        %v882 = vunpack.c.l.b16 %v843
        %v883 = vunpack.c.l.b16 %v844
        %v884 = vunpack.c.l.b16 %v845
        %v885 = vpack.c.b16 %v870, %v869
        %v886 = vpack.c.b16 %v872, %v871
        %v887 = vpack.c.b16 %v874, %v873
        %v888 = vpack.c.b16 %v876, %v875
        %v889 = vpack.c.b16 %v878, %v877
        %v890 = vpack.c.b16 %v880, %v879
        %v891 = vpack.c.b16 %v882, %v881
        %v892 = vpack.c.b16 %v884, %v883
        %901 = vmatprep.subr.bf16.mxu0 0
        %902 = vmatpush1.bf16.msra.mxu0 %v892
        %903 = vmatprep.subr.bf16.mxu0 0
        %904 = vmatpush1.bf16.msra.mxu0 %v891
        %905 = vmatprep.subr.bf16.mxu0 0
        %906 = vmatpush1.bf16.msra.mxu0 %v890
        %907 = vmatprep.subr.bf16.mxu0 0
        %908 = vmatpush1.bf16.msra.mxu0 %v889
        %909 = vmatprep.subr.bf16.mxu0 0
        %910 = vmatpush1.bf16.msra.mxu0 %v888
        %911 = vmatprep.subr.bf16.mxu0 0
        %912 = vmatpush1.bf16.msra.mxu0 %v887
        %913 = vmatprep.subr.bf16.mxu0 0
        %914 = vmatpush1.bf16.msra.mxu0 %v886
        %915 = vmatprep.subr.bf16.mxu0 0
        %916 = vmatpush1.bf16.msra.mxu0 %v885
        %917 = vmatprep.subr.bf16.mxu0 0
        %918 = vmatpush2.bf16.msra.mxu0 0
        %919 = vmatprep.subr.bf16.mxu0 0
        %920 = vmatpush2.bf16.msra.mxu0 0
        %921 = vmatprep.subr.bf16.mxu0 0
        %922 = vmatpush2.bf16.msra.mxu0 0
        %923 = vmatprep.subr.bf16.mxu0 0
        %924 = vmatpush2.bf16.msra.mxu0 0
        %925 = vmatprep.subr.bf16.mxu0 0
        %926 = vmatpush2.bf16.msra.mxu0 0
        %927 = vmatprep.subr.bf16.mxu0 0
        %928 = vmatpush2.bf16.msra.mxu0 0
        %929 = vmatprep.subr.bf16.mxu0 0
        %930 = vmatpush2.bf16.msra.mxu0 0
        %931 = vmatprep.subr.bf16.mxu0 0
        %932 = vmatpush2.bf16.msra.mxu0 0
        %933 = vmatprep.mubr.bf16.mxu0 0
        %934 = vmatmul.mubr.bf16.gmra.mxu0 %v829
        %v935 = vpop.f32.mrf.mxu0
        %v936 = vadd.f32 %v851, %v935
        %v937 = vpop.f32.mrf.mxu0
        %v938 = vpop.f32.mrf.mxu0
        %v939 = vadd.f32 %v851, %v938
        %v940 = vpop.f32.mrf.mxu0
        %941 = vdwg.mxu0
        %942 = vst [vmem:[#allocation18] sm:$0xff] %v936
        %943 = vst [vmem:[#allocation18 + $0x8] sm:$0xff] %v939
        // Predicated region
        $region84: #{tpu_custom_call.1} parent=51 // pred_check
          %p944 = pneg %p243
        $region85: #{tpu_custom_call.1} parent=51 // pred_check_branch
          %946 = sbr.rel (%p944) target = $region87
        $region86: #{tpu_custom_call.1} parent=51 // pred_region
          %s948 = ssub.s32 256, 256
          %949 = vsyncadd [#allocation12], %s948
          %s950 = sshll.u32 [#allocation18], 4
          %s951 = int_to_ptr.vmem [resolvable:$true] %s950
          %956 = dma.vmem_to_hbm [thread:$0]  %s951, 256, %s10, [#allocation12], 128, 128, 8
        $region87: #{tpu_custom_call.1} parent=51 // pred_fallthru
          _
        // Predicated region
        $region88: #{tpu_custom_call.1} parent=51 // pred_check
          %p957 = pneg %p243
        $region89: #{tpu_custom_call.1} parent=51 // pred_check_branch
          %959 = sbr.rel (%p957) target = $region91
        $region90: #{tpu_custom_call.1} parent=51 // pred_region
          %960 = dma.done [#allocation12], 256
        $region91: #{tpu_custom_call.1} parent=51 // pred_fallthru
          _
      $region52: #{tpu_custom_call.1} parent=5 // pred_fallthru
        _
      %p961 = scmp.le.s32.totalorder 2, %s27
      // Predicated region
      $region92: #{tpu_custom_call.1} parent=5 // pred_check
        %p962 = pneg %p961
      $region93: #{tpu_custom_call.1} parent=5 // pred_check_branch
        %964 = sbr.rel (%p962) target = $region95
      $region94: #{tpu_custom_call.1} parent=5 // pred_region
        %s965 = ssub.s32 %s27, 2
      $region95: #{tpu_custom_call.1} parent=5 // pred_fallthru
        _
    $region6: #{tpu_custom_call.1} parent=1 // loop_footer
      %s31 = sadd.s32 1, %s27
    $region7: #{tpu_custom_call.1} parent=1 // loop_footer_branch
      %26 = sbr.rel target = $region3
    $region8: #{tpu_custom_call.1} parent=1 // loop_exit
      _
    %966 = vsyncpa [#allocation11], 1
    %s967 = scalar_lea.sflag [#allocation11], 1
    %968 = vsyncpa %s967, 1
    %969 = vsyncpa [#allocation14], 1
    %970 = vsyncpa [#allocation12], 1
    %s971 = scalar_lea.sflag [#allocation12], 1
    %972 = vsyncpa %s971, 1

</llo_original>
